<compile_context>
chip_gen: v6e
topology: v6e:2x2x1
jax: 0.10.0
libtpu: 0.0.40
codegen_flags: <defaults>
</compile_context>

<pallas_src>
import math
import functools

import jax
import jax.numpy as jnp
from jax.experimental import pallas as pl
from jax.experimental.pallas import tpu as pltpu


# ----------------------------------------------------------------------------
# Kernel: gather S embedding rows from HBM, scale, add positional encoding.
# ----------------------------------------------------------------------------
def embedding_kernel(ids_ref, table_hbm, pe_ref, o_ref, gather_buf, sems, *,
                     scale, seq_len):
    """One grid step = one sequence of `seq_len` tokens.

    ids_ref    : SMEM (B*S,) int32   scalar-prefetched token ids
    table_hbm  : HBM  (V, D)         raw ref, manual DMA gather
    pe_ref     : VMEM (S, D)         pe[:S] (constant block, fetched once)
    o_ref      : VMEM (S, D)         output block for this sequence
    gather_buf : VMEM (S, D)         scratch landing zone for gathered rows
    sems       : DMA semaphores, shape (S,)
    """
    b = pl.program_id(0)

    # Issue all S row gathers (each row is D * itemsize bytes), then wait.
    copies = []
    for s in range(seq_len):
        tok = ids_ref[b * seq_len + s]                     # SMEM scalar read
        cp = pltpu.make_async_copy(
            table_hbm.at[pl.ds(tok, 1), :],                # (1, D) HBM slice
            gather_buf.at[pl.ds(s, 1), :],                 # (1, D) VMEM slot
            sems.at[s],
        )
        cp.start()
        copies.append(cp)
    for cp in copies:
        cp.wait()

    # x * sqrt(D) + positional encoding.  Dropout is identity in eval mode.
    # TODO(synk): training-mode dropout (p=0.1) is not implemented (eval only).
    o_ref[...] = (gather_buf[...] * scale + pe_ref[...]).astype(o_ref.dtype)


# ----------------------------------------------------------------------------
# Wrapper
# ----------------------------------------------------------------------------
def embedding_forward(ids, emb_table, pe):
    """ids: (B, S) int32 token ids; emb_table: (V, D); pe: (max_len, D)."""
    B, S = ids.shape
    V, D = emb_table.shape
    N = B * S
    scale = math.sqrt(D)

    # This implementation needs lane/sublane-aligned tiles.
    assert D % 128 == 0, "embedding dim must be a multiple of 128 (lane dim)"
    assert S % 8 == 0, "sequence length must be a multiple of 8 (sublane dim)"

    ids_flat = ids.reshape(N).astype(jnp.int32)
    itemsize = emb_table.dtype.itemsize

    # Mem-bound gather: ids + gathered rows + pe (read once) + output write.
    cost = pl.CostEstimate(
        flops=0,
        transcendentals=0,
        bytes_accessed=N * 4 + N * D * itemsize + S * D * itemsize + N * D * itemsize,
    )

    out_flat = pl.pallas_call(
        functools.partial(embedding_kernel, scale=scale, seq_len=S),
        out_shape=jax.ShapeDtypeStruct((N, D), emb_table.dtype),
        grid_spec=pltpu.PrefetchScalarGridSpec(
            num_scalar_prefetch=1,                              # ids -> SMEM
            grid=(B,),                                          # one step per sequence
            in_specs=[
                pl.BlockSpec(memory_space=pl.ANY),              # table stays in HBM
                pl.BlockSpec((S, D), lambda b, ids: (0, 0)),    # pe[:S], constant block
            ],
            out_specs=pl.BlockSpec((S, D), lambda b, ids: (b, 0)),
            scratch_shapes=[
                pltpu.VMEM((S, D), emb_table.dtype),            # gather buffer
                pltpu.SemaphoreType.DMA((S,)),                  # one sem per row DMA
            ],
        ),
        compiler_params=pltpu.CompilerParams(
            dimension_semantics=("parallel",)),                 # shards over TCs on v7x
        cost_estimate=cost,
    )(ids_flat, emb_table, pe)

    return out_flat.reshape(B, S, D)


def build_positional_encoding(d_x, max_len=5000, dtype=jnp.float32):
    """Same buffer as PositionalEncoding.__init__ (sin on even cols, cos on odd)."""
    position = jnp.arange(max_len, dtype=jnp.float32)[:, None]
    div_term = jnp.exp(jnp.arange(0, d_x, 2, dtype=jnp.float32)
                       * (-math.log(10000.0) / d_x))
    pe = jnp.zeros((max_len, d_x), jnp.float32)
    pe = pe.at[:, 0::2].set(jnp.sin(position * div_term))
    pe = pe.at[:, 1::2].set(jnp.cos(position * div_term))
    return pe.astype(dtype)


# ----------------------------------------------------------------------------
if __name__ == "__main__":
    B, S = 2, 8
    vocab_size, d = 1024, 128          # lane-aligned feature dim

    key = jax.random.PRNGKey(0)
    k_ids, k_emb = jax.random.split(key)
    ids = jax.random.randint(k_ids, (B, S), 0, vocab_size, dtype=jnp.int32)
    emb_table = jax.random.normal(k_emb, (vocab_size, d), jnp.float32) * 0.02
    pe = build_positional_encoding(d, max_len=5000)

    fwd = jax.jit(embedding_forward)
    out = jax.block_until_ready(fwd(ids, emb_table, pe))

    # Pure-JAX reference of the PyTorch forward (eval mode).
    ref = jnp.take(emb_table, ids, axis=0) * math.sqrt(d) + pe[:S][None, :, :]

    assert out.shape == (B, S, d)
    assert bool(jnp.all(jnp.isfinite(out)))
    assert bool(jnp.allclose(out, ref, atol=1e-4, rtol=1e-4))
    print("KERNEL_OK")
</pallas_src>

<mosaic_0001>
module attributes {stable_mosaic.version = 11 : i64} {
  func.func @embedding_kernel(%arg0: i32, %arg1: memref<16xi32, #tpu.memory_space<smem>>, %arg2: memref<1024x128xf32, #tpu.memory_space<any>>, %arg3: memref<8x128xf32, #tpu.memory_space<vmem>>, %arg4: memref<8x128xf32, #tpu.memory_space<vmem>>, %arg5: memref<8x128xf32, #tpu.memory_space<vmem>>, %arg6: memref<8x!tpu.dma_semaphore, #tpu.memory_space<semaphore_mem>>) attributes {dimension_semantics = [#tpu.dimension_semantics<parallel>], iteration_bounds = array<i64: 2>, scalar_prefetch = 1 : i64, scratch_operands = 2 : i64, tpu.core_type = #tpu.core_type<tc>, window_params = [{}, {transform_indices = @transform_1, window_bounds = array<i64: 8, 128>}, {transform_indices = @transform_2, window_bounds = array<i64: 8, 128>}]} {
    %c8_i32 = arith.constant 8 : i32
    %0 = arith.muli %arg0, %c8_i32 : i32
    %c0_i32 = arith.constant 0 : i32
    %1 = arith.addi %0, %c0_i32 : i32
    %2 = arith.index_cast %1 : i32 to index
    %3 = memref.load %arg1[%2] : memref<16xi32, #tpu.memory_space<smem>>
    %c0_i32_0 = arith.constant 0 : i32
    %c0_i32_1 = arith.constant 0 : i32
    %4 = tpu.memref_slice %arg2[%3, %c0_i32_1] : memref<1024x128xf32, #tpu.memory_space<any>> -> memref<1x128xf32, #tpu.memory_space<any>>
    %c0_i32_2 = arith.constant 0 : i32
    %c0_i32_3 = arith.constant 0 : i32
    %5 = tpu.memref_slice %arg5[%c0_i32_2, %c0_i32_3] : memref<8x128xf32, #tpu.memory_space<vmem>> -> memref<1x128xf32, #tpu.memory_space<vmem>>
    %6 = tpu.memref_slice %arg6[%c0_i32_0] : memref<8x!tpu.dma_semaphore, #tpu.memory_space<semaphore_mem>> -> memref<1x!tpu.dma_semaphore, #tpu.memory_space<semaphore_mem>>
    %7 = tpu.memref_squeeze %6 : memref<1x!tpu.dma_semaphore, #tpu.memory_space<semaphore_mem>> -> memref<!tpu.dma_semaphore, #tpu.memory_space<semaphore_mem>>
    tpu.enqueue_dma source(%4 : memref<1x128xf32, #tpu.memory_space<any>>) target(%5 : memref<1x128xf32, #tpu.memory_space<vmem>>) target_semaphore(%7 : memref<!tpu.dma_semaphore, #tpu.memory_space<semaphore_mem>>)
    %c8_i32_4 = arith.constant 8 : i32
    %8 = arith.muli %arg0, %c8_i32_4 : i32
    %c1_i32 = arith.constant 1 : i32
    %9 = arith.addi %8, %c1_i32 : i32
    %10 = arith.index_cast %9 : i32 to index
    %11 = memref.load %arg1[%10] : memref<16xi32, #tpu.memory_space<smem>>
    %c1_i32_5 = arith.constant 1 : i32
    %c0_i32_6 = arith.constant 0 : i32
    %12 = tpu.memref_slice %arg2[%11, %c0_i32_6] : memref<1024x128xf32, #tpu.memory_space<any>> -> memref<1x128xf32, #tpu.memory_space<any>>
    %c1_i32_7 = arith.constant 1 : i32
    %c0_i32_8 = arith.constant 0 : i32
    %13 = tpu.memref_slice %arg5[%c1_i32_7, %c0_i32_8] : memref<8x128xf32, #tpu.memory_space<vmem>> -> memref<1x128xf32, #tpu.memory_space<vmem>>
    %14 = tpu.memref_slice %arg6[%c1_i32_5] : memref<8x!tpu.dma_semaphore, #tpu.memory_space<semaphore_mem>> -> memref<1x!tpu.dma_semaphore, #tpu.memory_space<semaphore_mem>>
    %15 = tpu.memref_squeeze %14 : memref<1x!tpu.dma_semaphore, #tpu.memory_space<semaphore_mem>> -> memref<!tpu.dma_semaphore, #tpu.memory_space<semaphore_mem>>
    tpu.enqueue_dma source(%12 : memref<1x128xf32, #tpu.memory_space<any>>) target(%13 : memref<1x128xf32, #tpu.memory_space<vmem>>) target_semaphore(%15 : memref<!tpu.dma_semaphore, #tpu.memory_space<semaphore_mem>>)
    %c8_i32_9 = arith.constant 8 : i32
    %16 = arith.muli %arg0, %c8_i32_9 : i32
    %c2_i32 = arith.constant 2 : i32
    %17 = arith.addi %16, %c2_i32 : i32
    %18 = arith.index_cast %17 : i32 to index
    %19 = memref.load %arg1[%18] : memref<16xi32, #tpu.memory_space<smem>>
    %c2_i32_10 = arith.constant 2 : i32
    %c0_i32_11 = arith.constant 0 : i32
    %20 = tpu.memref_slice %arg2[%19, %c0_i32_11] : memref<1024x128xf32, #tpu.memory_space<any>> -> memref<1x128xf32, #tpu.memory_space<any>>
    %c2_i32_12 = arith.constant 2 : i32
    %c0_i32_13 = arith.constant 0 : i32
    %21 = tpu.memref_slice %arg5[%c2_i32_12, %c0_i32_13] : memref<8x128xf32, #tpu.memory_space<vmem>> -> memref<1x128xf32, #tpu.memory_space<vmem>>
    %22 = tpu.memref_slice %arg6[%c2_i32_10] : memref<8x!tpu.dma_semaphore, #tpu.memory_space<semaphore_mem>> -> memref<1x!tpu.dma_semaphore, #tpu.memory_space<semaphore_mem>>
    %23 = tpu.memref_squeeze %22 : memref<1x!tpu.dma_semaphore, #tpu.memory_space<semaphore_mem>> -> memref<!tpu.dma_semaphore, #tpu.memory_space<semaphore_mem>>
    tpu.enqueue_dma source(%20 : memref<1x128xf32, #tpu.memory_space<any>>) target(%21 : memref<1x128xf32, #tpu.memory_space<vmem>>) target_semaphore(%23 : memref<!tpu.dma_semaphore, #tpu.memory_space<semaphore_mem>>)
    %c8_i32_14 = arith.constant 8 : i32
    %24 = arith.muli %arg0, %c8_i32_14 : i32
    %c3_i32 = arith.constant 3 : i32
    %25 = arith.addi %24, %c3_i32 : i32
    %26 = arith.index_cast %25 : i32 to index
    %27 = memref.load %arg1[%26] : memref<16xi32, #tpu.memory_space<smem>>
    %c3_i32_15 = arith.constant 3 : i32
    %c0_i32_16 = arith.constant 0 : i32
    %28 = tpu.memref_slice %arg2[%27, %c0_i32_16] : memref<1024x128xf32, #tpu.memory_space<any>> -> memref<1x128xf32, #tpu.memory_space<any>>
    %c3_i32_17 = arith.constant 3 : i32
    %c0_i32_18 = arith.constant 0 : i32
    %29 = tpu.memref_slice %arg5[%c3_i32_17, %c0_i32_18] : memref<8x128xf32, #tpu.memory_space<vmem>> -> memref<1x128xf32, #tpu.memory_space<vmem>>
    %30 = tpu.memref_slice %arg6[%c3_i32_15] : memref<8x!tpu.dma_semaphore, #tpu.memory_space<semaphore_mem>> -> memref<1x!tpu.dma_semaphore, #tpu.memory_space<semaphore_mem>>
    %31 = tpu.memref_squeeze %30 : memref<1x!tpu.dma_semaphore, #tpu.memory_space<semaphore_mem>> -> memref<!tpu.dma_semaphore, #tpu.memory_space<semaphore_mem>>
    tpu.enqueue_dma source(%28 : memref<1x128xf32, #tpu.memory_space<any>>) target(%29 : memref<1x128xf32, #tpu.memory_space<vmem>>) target_semaphore(%31 : memref<!tpu.dma_semaphore, #tpu.memory_space<semaphore_mem>>)
    %c8_i32_19 = arith.constant 8 : i32
    %32 = arith.muli %arg0, %c8_i32_19 : i32
    %c4_i32 = arith.constant 4 : i32
    %33 = arith.addi %32, %c4_i32 : i32
    %34 = arith.index_cast %33 : i32 to index
    %35 = memref.load %arg1[%34] : memref<16xi32, #tpu.memory_space<smem>>
    %c4_i32_20 = arith.constant 4 : i32
    %c0_i32_21 = arith.constant 0 : i32
    %36 = tpu.memref_slice %arg2[%35, %c0_i32_21] : memref<1024x128xf32, #tpu.memory_space<any>> -> memref<1x128xf32, #tpu.memory_space<any>>
    %c4_i32_22 = arith.constant 4 : i32
    %c0_i32_23 = arith.constant 0 : i32
    %37 = tpu.memref_slice %arg5[%c4_i32_22, %c0_i32_23] : memref<8x128xf32, #tpu.memory_space<vmem>> -> memref<1x128xf32, #tpu.memory_space<vmem>>
    %38 = tpu.memref_slice %arg6[%c4_i32_20] : memref<8x!tpu.dma_semaphore, #tpu.memory_space<semaphore_mem>> -> memref<1x!tpu.dma_semaphore, #tpu.memory_space<semaphore_mem>>
    %39 = tpu.memref_squeeze %38 : memref<1x!tpu.dma_semaphore, #tpu.memory_space<semaphore_mem>> -> memref<!tpu.dma_semaphore, #tpu.memory_space<semaphore_mem>>
    tpu.enqueue_dma source(%36 : memref<1x128xf32, #tpu.memory_space<any>>) target(%37 : memref<1x128xf32, #tpu.memory_space<vmem>>) target_semaphore(%39 : memref<!tpu.dma_semaphore, #tpu.memory_space<semaphore_mem>>)
    %c8_i32_24 = arith.constant 8 : i32
    %40 = arith.muli %arg0, %c8_i32_24 : i32
    %c5_i32 = arith.constant 5 : i32
    %41 = arith.addi %40, %c5_i32 : i32
    %42 = arith.index_cast %41 : i32 to index
    %43 = memref.load %arg1[%42] : memref<16xi32, #tpu.memory_space<smem>>
    %c5_i32_25 = arith.constant 5 : i32
    %c0_i32_26 = arith.constant 0 : i32
    %44 = tpu.memref_slice %arg2[%43, %c0_i32_26] : memref<1024x128xf32, #tpu.memory_space<any>> -> memref<1x128xf32, #tpu.memory_space<any>>
    %c5_i32_27 = arith.constant 5 : i32
    %c0_i32_28 = arith.constant 0 : i32
    %45 = tpu.memref_slice %arg5[%c5_i32_27, %c0_i32_28] : memref<8x128xf32, #tpu.memory_space<vmem>> -> memref<1x128xf32, #tpu.memory_space<vmem>>
    %46 = tpu.memref_slice %arg6[%c5_i32_25] : memref<8x!tpu.dma_semaphore, #tpu.memory_space<semaphore_mem>> -> memref<1x!tpu.dma_semaphore, #tpu.memory_space<semaphore_mem>>
    %47 = tpu.memref_squeeze %46 : memref<1x!tpu.dma_semaphore, #tpu.memory_space<semaphore_mem>> -> memref<!tpu.dma_semaphore, #tpu.memory_space<semaphore_mem>>
    tpu.enqueue_dma source(%44 : memref<1x128xf32, #tpu.memory_space<any>>) target(%45 : memref<1x128xf32, #tpu.memory_space<vmem>>) target_semaphore(%47 : memref<!tpu.dma_semaphore, #tpu.memory_space<semaphore_mem>>)
    %c8_i32_29 = arith.constant 8 : i32
    %48 = arith.muli %arg0, %c8_i32_29 : i32
    %c6_i32 = arith.constant 6 : i32
    %49 = arith.addi %48, %c6_i32 : i32
    %50 = arith.index_cast %49 : i32 to index
    %51 = memref.load %arg1[%50] : memref<16xi32, #tpu.memory_space<smem>>
    %c6_i32_30 = arith.constant 6 : i32
    %c0_i32_31 = arith.constant 0 : i32
    %52 = tpu.memref_slice %arg2[%51, %c0_i32_31] : memref<1024x128xf32, #tpu.memory_space<any>> -> memref<1x128xf32, #tpu.memory_space<any>>
    %c6_i32_32 = arith.constant 6 : i32
    %c0_i32_33 = arith.constant 0 : i32
    %53 = tpu.memref_slice %arg5[%c6_i32_32, %c0_i32_33] : memref<8x128xf32, #tpu.memory_space<vmem>> -> memref<1x128xf32, #tpu.memory_space<vmem>>
    %54 = tpu.memref_slice %arg6[%c6_i32_30] : memref<8x!tpu.dma_semaphore, #tpu.memory_space<semaphore_mem>> -> memref<1x!tpu.dma_semaphore, #tpu.memory_space<semaphore_mem>>
    %55 = tpu.memref_squeeze %54 : memref<1x!tpu.dma_semaphore, #tpu.memory_space<semaphore_mem>> -> memref<!tpu.dma_semaphore, #tpu.memory_space<semaphore_mem>>
    tpu.enqueue_dma source(%52 : memref<1x128xf32, #tpu.memory_space<any>>) target(%53 : memref<1x128xf32, #tpu.memory_space<vmem>>) target_semaphore(%55 : memref<!tpu.dma_semaphore, #tpu.memory_space<semaphore_mem>>)
    %c8_i32_34 = arith.constant 8 : i32
    %56 = arith.muli %arg0, %c8_i32_34 : i32
    %c7_i32 = arith.constant 7 : i32
    %57 = arith.addi %56, %c7_i32 : i32
    %58 = arith.index_cast %57 : i32 to index
    %59 = memref.load %arg1[%58] : memref<16xi32, #tpu.memory_space<smem>>
    %c7_i32_35 = arith.constant 7 : i32
    %c0_i32_36 = arith.constant 0 : i32
    %60 = tpu.memref_slice %arg2[%59, %c0_i32_36] : memref<1024x128xf32, #tpu.memory_space<any>> -> memref<1x128xf32, #tpu.memory_space<any>>
    %c7_i32_37 = arith.constant 7 : i32
    %c0_i32_38 = arith.constant 0 : i32
    %61 = tpu.memref_slice %arg5[%c7_i32_37, %c0_i32_38] : memref<8x128xf32, #tpu.memory_space<vmem>> -> memref<1x128xf32, #tpu.memory_space<vmem>>
    %62 = tpu.memref_slice %arg6[%c7_i32_35] : memref<8x!tpu.dma_semaphore, #tpu.memory_space<semaphore_mem>> -> memref<1x!tpu.dma_semaphore, #tpu.memory_space<semaphore_mem>>
    %63 = tpu.memref_squeeze %62 : memref<1x!tpu.dma_semaphore, #tpu.memory_space<semaphore_mem>> -> memref<!tpu.dma_semaphore, #tpu.memory_space<semaphore_mem>>
    tpu.enqueue_dma source(%60 : memref<1x128xf32, #tpu.memory_space<any>>) target(%61 : memref<1x128xf32, #tpu.memory_space<vmem>>) target_semaphore(%63 : memref<!tpu.dma_semaphore, #tpu.memory_space<semaphore_mem>>)
    %c0_i32_39 = arith.constant 0 : i32
    %c0_i32_40 = arith.constant 0 : i32
    %64 = tpu.memref_slice %arg2[%3, %c0_i32_40] : memref<1024x128xf32, #tpu.memory_space<any>> -> memref<1x128xf32, #tpu.memory_space<any>>
    %c0_i32_41 = arith.constant 0 : i32
    %c0_i32_42 = arith.constant 0 : i32
    %65 = tpu.memref_slice %arg5[%c0_i32_41, %c0_i32_42] : memref<8x128xf32, #tpu.memory_space<vmem>> -> memref<1x128xf32, #tpu.memory_space<vmem>>
    %66 = tpu.memref_slice %arg6[%c0_i32_39] : memref<8x!tpu.dma_semaphore, #tpu.memory_space<semaphore_mem>> -> memref<1x!tpu.dma_semaphore, #tpu.memory_space<semaphore_mem>>
    %67 = tpu.memref_squeeze %66 : memref<1x!tpu.dma_semaphore, #tpu.memory_space<semaphore_mem>> -> memref<!tpu.dma_semaphore, #tpu.memory_space<semaphore_mem>>
    tpu.wait_dma2 semaphore(%67 : memref<!tpu.dma_semaphore, #tpu.memory_space<semaphore_mem>>) src(%64 : memref<1x128xf32, #tpu.memory_space<any>>) dst(%65 : memref<1x128xf32, #tpu.memory_space<vmem>>)
    %c1_i32_43 = arith.constant 1 : i32
    %c0_i32_44 = arith.constant 0 : i32
    %68 = tpu.memref_slice %arg2[%11, %c0_i32_44] : memref<1024x128xf32, #tpu.memory_space<any>> -> memref<1x128xf32, #tpu.memory_space<any>>
    %c1_i32_45 = arith.constant 1 : i32
    %c0_i32_46 = arith.constant 0 : i32
    %69 = tpu.memref_slice %arg5[%c1_i32_45, %c0_i32_46] : memref<8x128xf32, #tpu.memory_space<vmem>> -> memref<1x128xf32, #tpu.memory_space<vmem>>
    %70 = tpu.memref_slice %arg6[%c1_i32_43] : memref<8x!tpu.dma_semaphore, #tpu.memory_space<semaphore_mem>> -> memref<1x!tpu.dma_semaphore, #tpu.memory_space<semaphore_mem>>
    %71 = tpu.memref_squeeze %70 : memref<1x!tpu.dma_semaphore, #tpu.memory_space<semaphore_mem>> -> memref<!tpu.dma_semaphore, #tpu.memory_space<semaphore_mem>>
    tpu.wait_dma2 semaphore(%71 : memref<!tpu.dma_semaphore, #tpu.memory_space<semaphore_mem>>) src(%68 : memref<1x128xf32, #tpu.memory_space<any>>) dst(%69 : memref<1x128xf32, #tpu.memory_space<vmem>>)
    %c2_i32_47 = arith.constant 2 : i32
    %c0_i32_48 = arith.constant 0 : i32
    %72 = tpu.memref_slice %arg2[%19, %c0_i32_48] : memref<1024x128xf32, #tpu.memory_space<any>> -> memref<1x128xf32, #tpu.memory_space<any>>
    %c2_i32_49 = arith.constant 2 : i32
    %c0_i32_50 = arith.constant 0 : i32
    %73 = tpu.memref_slice %arg5[%c2_i32_49, %c0_i32_50] : memref<8x128xf32, #tpu.memory_space<vmem>> -> memref<1x128xf32, #tpu.memory_space<vmem>>
    %74 = tpu.memref_slice %arg6[%c2_i32_47] : memref<8x!tpu.dma_semaphore, #tpu.memory_space<semaphore_mem>> -> memref<1x!tpu.dma_semaphore, #tpu.memory_space<semaphore_mem>>
    %75 = tpu.memref_squeeze %74 : memref<1x!tpu.dma_semaphore, #tpu.memory_space<semaphore_mem>> -> memref<!tpu.dma_semaphore, #tpu.memory_space<semaphore_mem>>
    tpu.wait_dma2 semaphore(%75 : memref<!tpu.dma_semaphore, #tpu.memory_space<semaphore_mem>>) src(%72 : memref<1x128xf32, #tpu.memory_space<any>>) dst(%73 : memref<1x128xf32, #tpu.memory_space<vmem>>)
    %c3_i32_51 = arith.constant 3 : i32
    %c0_i32_52 = arith.constant 0 : i32
    %76 = tpu.memref_slice %arg2[%27, %c0_i32_52] : memref<1024x128xf32, #tpu.memory_space<any>> -> memref<1x128xf32, #tpu.memory_space<any>>
    %c3_i32_53 = arith.constant 3 : i32
    %c0_i32_54 = arith.constant 0 : i32
    %77 = tpu.memref_slice %arg5[%c3_i32_53, %c0_i32_54] : memref<8x128xf32, #tpu.memory_space<vmem>> -> memref<1x128xf32, #tpu.memory_space<vmem>>
    %78 = tpu.memref_slice %arg6[%c3_i32_51] : memref<8x!tpu.dma_semaphore, #tpu.memory_space<semaphore_mem>> -> memref<1x!tpu.dma_semaphore, #tpu.memory_space<semaphore_mem>>
    %79 = tpu.memref_squeeze %78 : memref<1x!tpu.dma_semaphore, #tpu.memory_space<semaphore_mem>> -> memref<!tpu.dma_semaphore, #tpu.memory_space<semaphore_mem>>
    tpu.wait_dma2 semaphore(%79 : memref<!tpu.dma_semaphore, #tpu.memory_space<semaphore_mem>>) src(%76 : memref<1x128xf32, #tpu.memory_space<any>>) dst(%77 : memref<1x128xf32, #tpu.memory_space<vmem>>)
    %c4_i32_55 = arith.constant 4 : i32
    %c0_i32_56 = arith.constant 0 : i32
    %80 = tpu.memref_slice %arg2[%35, %c0_i32_56] : memref<1024x128xf32, #tpu.memory_space<any>> -> memref<1x128xf32, #tpu.memory_space<any>>
    %c4_i32_57 = arith.constant 4 : i32
    %c0_i32_58 = arith.constant 0 : i32
    %81 = tpu.memref_slice %arg5[%c4_i32_57, %c0_i32_58] : memref<8x128xf32, #tpu.memory_space<vmem>> -> memref<1x128xf32, #tpu.memory_space<vmem>>
    %82 = tpu.memref_slice %arg6[%c4_i32_55] : memref<8x!tpu.dma_semaphore, #tpu.memory_space<semaphore_mem>> -> memref<1x!tpu.dma_semaphore, #tpu.memory_space<semaphore_mem>>
    %83 = tpu.memref_squeeze %82 : memref<1x!tpu.dma_semaphore, #tpu.memory_space<semaphore_mem>> -> memref<!tpu.dma_semaphore, #tpu.memory_space<semaphore_mem>>
    tpu.wait_dma2 semaphore(%83 : memref<!tpu.dma_semaphore, #tpu.memory_space<semaphore_mem>>) src(%80 : memref<1x128xf32, #tpu.memory_space<any>>) dst(%81 : memref<1x128xf32, #tpu.memory_space<vmem>>)
    %c5_i32_59 = arith.constant 5 : i32
    %c0_i32_60 = arith.constant 0 : i32
    %84 = tpu.memref_slice %arg2[%43, %c0_i32_60] : memref<1024x128xf32, #tpu.memory_space<any>> -> memref<1x128xf32, #tpu.memory_space<any>>
    %c5_i32_61 = arith.constant 5 : i32
    %c0_i32_62 = arith.constant 0 : i32
    %85 = tpu.memref_slice %arg5[%c5_i32_61, %c0_i32_62] : memref<8x128xf32, #tpu.memory_space<vmem>> -> memref<1x128xf32, #tpu.memory_space<vmem>>
    %86 = tpu.memref_slice %arg6[%c5_i32_59] : memref<8x!tpu.dma_semaphore, #tpu.memory_space<semaphore_mem>> -> memref<1x!tpu.dma_semaphore, #tpu.memory_space<semaphore_mem>>
    %87 = tpu.memref_squeeze %86 : memref<1x!tpu.dma_semaphore, #tpu.memory_space<semaphore_mem>> -> memref<!tpu.dma_semaphore, #tpu.memory_space<semaphore_mem>>
    tpu.wait_dma2 semaphore(%87 : memref<!tpu.dma_semaphore, #tpu.memory_space<semaphore_mem>>) src(%84 : memref<1x128xf32, #tpu.memory_space<any>>) dst(%85 : memref<1x128xf32, #tpu.memory_space<vmem>>)
    %c6_i32_63 = arith.constant 6 : i32
    %c0_i32_64 = arith.constant 0 : i32
    %88 = tpu.memref_slice %arg2[%51, %c0_i32_64] : memref<1024x128xf32, #tpu.memory_space<any>> -> memref<1x128xf32, #tpu.memory_space<any>>
    %c6_i32_65 = arith.constant 6 : i32
    %c0_i32_66 = arith.constant 0 : i32
    %89 = tpu.memref_slice %arg5[%c6_i32_65, %c0_i32_66] : memref<8x128xf32, #tpu.memory_space<vmem>> -> memref<1x128xf32, #tpu.memory_space<vmem>>
    %90 = tpu.memref_slice %arg6[%c6_i32_63] : memref<8x!tpu.dma_semaphore, #tpu.memory_space<semaphore_mem>> -> memref<1x!tpu.dma_semaphore, #tpu.memory_space<semaphore_mem>>
    %91 = tpu.memref_squeeze %90 : memref<1x!tpu.dma_semaphore, #tpu.memory_space<semaphore_mem>> -> memref<!tpu.dma_semaphore, #tpu.memory_space<semaphore_mem>>
    tpu.wait_dma2 semaphore(%91 : memref<!tpu.dma_semaphore, #tpu.memory_space<semaphore_mem>>) src(%88 : memref<1x128xf32, #tpu.memory_space<any>>) dst(%89 : memref<1x128xf32, #tpu.memory_space<vmem>>)
    %c7_i32_67 = arith.constant 7 : i32
    %c0_i32_68 = arith.constant 0 : i32
    %92 = tpu.memref_slice %arg2[%59, %c0_i32_68] : memref<1024x128xf32, #tpu.memory_space<any>> -> memref<1x128xf32, #tpu.memory_space<any>>
    %c7_i32_69 = arith.constant 7 : i32
    %c0_i32_70 = arith.constant 0 : i32
    %93 = tpu.memref_slice %arg5[%c7_i32_69, %c0_i32_70] : memref<8x128xf32, #tpu.memory_space<vmem>> -> memref<1x128xf32, #tpu.memory_space<vmem>>
    %94 = tpu.memref_slice %arg6[%c7_i32_67] : memref<8x!tpu.dma_semaphore, #tpu.memory_space<semaphore_mem>> -> memref<1x!tpu.dma_semaphore, #tpu.memory_space<semaphore_mem>>
    %95 = tpu.memref_squeeze %94 : memref<1x!tpu.dma_semaphore, #tpu.memory_space<semaphore_mem>> -> memref<!tpu.dma_semaphore, #tpu.memory_space<semaphore_mem>>
    tpu.wait_dma2 semaphore(%95 : memref<!tpu.dma_semaphore, #tpu.memory_space<semaphore_mem>>) src(%92 : memref<1x128xf32, #tpu.memory_space<any>>) dst(%93 : memref<1x128xf32, #tpu.memory_space<vmem>>)
    %c0 = arith.constant 0 : index
    %c0_71 = arith.constant 0 : index
    %96 = vector.load %arg5[%c0, %c0_71] : memref<8x128xf32, #tpu.memory_space<vmem>>, vector<8x128xf32>
    %cst = arith.constant 11.3137083 : f32
    %97 = vector.broadcast %cst : f32 to vector<8x128xf32>
    %98 = arith.mulf %96, %97 : vector<8x128xf32>
    %c0_72 = arith.constant 0 : index
    %c0_73 = arith.constant 0 : index
    %99 = vector.load %arg3[%c0_72, %c0_73] : memref<8x128xf32, #tpu.memory_space<vmem>>, vector<8x128xf32>
    %100 = arith.addf %98, %99 : vector<8x128xf32>
    %c0_74 = arith.constant 0 : index
    %c0_75 = arith.constant 0 : index
    %101 = vector.load %arg4[%c0_74, %c0_75] : memref<8x128xf32, #tpu.memory_space<vmem>>, vector<8x128xf32>
    tpu.vector_store %arg4[%c0_74, %c0_75], %100 {strides = array<i32>} : memref<8x128xf32, #tpu.memory_space<vmem>>, vector<8x128xf32>,
    return
  }
  func.func @transform_1(%arg0: i32, %arg1: memref<16xi32, #tpu.memory_space<smem>>) -> (i32, i32) {
    %c0_i32 = arith.constant 0 : i32
    %c0_i32_0 = arith.constant 0 : i32
    %c0_i32_1 = arith.constant 0 : i32
    return %c0_i32, %c0_i32_0 : i32, i32
  }
  func.func @transform_2(%arg0: i32, %arg1: memref<16xi32, #tpu.memory_space<smem>>) -> (i32, i32) {
    %c0_i32 = arith.constant 0 : i32
    %c0_i32_0 = arith.constant 0 : i32
    return %arg0, %c0_i32 : i32, i32
  }
}

</mosaic_0001>

<llo_original>
// kernel: embedding_forward.1
$region0: #{embedding_forward.1}
  #allocation0 [shape = 'u32[]', space=smem, size = 0x4, offset = 0x4, fixed_abs, tag = 'smem constant byte address 0x4 - core index']
  #allocation1 [shape = 'u32[144,128]{1,0:T(1,128)}', space=vmem, size = 0x12000, scoped, tag = 'internal scratch']
  #allocation2 [shape = 'f32[8,128]{1,0:T(8,128)}', space=vmem, size = 0x1000, scoped, tag = 'scratch operand']
  #allocation3 [shape = 's32[8]{0}', space=sflag, size = 0x20, scoped, tag = 'scratch operand']
  #allocation4 [shape = 's32[1]{0}', space=sflag, size = 0x4, scoped, tag = 'scoped memory for embedding_forward.1']
  #allocation5 [shape = 'u8[512]{0}', space=smem, size = 0x200, scoped, tag = 'prefetched SMEM operand 0']
  #allocation10 [shape = 's32[]', space=sflag, size = 0x4, offset = 0, fixed_abs, tag = 'sflag constant byte address 0x0 - dummy sync flag']
  #allocation11 [shape = 's32[]', space=sflag, size = 0x4, offset = 0, fixed_abs, tag = 'sflag constant byte address 0x0 - dummy sync flag']
  #allocation12 [shape = 'u32[]', space=smem, size = 0x4, offset = 0x44, fixed_abs, tag = 'smem constant byte address 0x44 - assertion arg 0']
  #allocation13 [shape = 'u32[]', space=smem, size = 0x4, offset = 0x48, fixed_abs, tag = 'smem constant byte address 0x48 - assertion arg 1']
  #allocation14 [shape = 's32[]', space=sflag, size = 0x4, offset = 0, fixed_abs, tag = 'sflag constant byte address 0x0 - dummy sync flag']
  #allocation15 [shape = 's32[]', space=sflag, size = 0x4, offset = 0, fixed_abs, tag = 'sflag constant byte address 0x0 - dummy sync flag']
  #allocation16 [shape = 's32[]', space=sflag, size = 0x4, offset = 0, fixed_abs, tag = 'sflag constant byte address 0x0 - dummy sync flag']
  #allocation17 [shape = 's32[]', space=sflag, size = 0x4, offset = 0, fixed_abs, tag = 'sflag constant byte address 0x0 - dummy sync flag']
  #allocation18 [shape = 's32[]', space=sflag, size = 0x4, offset = 0, fixed_abs, tag = 'sflag constant byte address 0x0 - dummy sync flag']
  #allocation19 [shape = 's32[]', space=sflag, size = 0x4, offset = 0, fixed_abs, tag = 'sflag constant byte address 0x0 - dummy sync flag']
  #allocation20 [shape = 's32[]', space=sflag, size = 0x4, offset = 0, fixed_abs, tag = 'sflag constant byte address 0x0 - dummy sync flag']
  #allocation21 [shape = 's32[]', space=sflag, size = 0x4, offset = 0, fixed_abs, tag = 'sflag constant byte address 0x0 - dummy sync flag']
  #allocation22 [shape = 's32[]', space=sflag, size = 0x4, offset = 0, fixed_abs, tag = 'sflag constant byte address 0x0 - dummy sync flag']
  #allocation23 [shape = 's32[]', space=sflag, size = 0x4, offset = 0, fixed_abs, tag = 'sflag constant byte address 0x0 - dummy sync flag']
  #allocation24 [shape = 's32[]', space=sflag, size = 0x4, offset = 0, fixed_abs, tag = 'sflag constant byte address 0x0 - dummy sync flag']
  #allocation25 [shape = 's32[]', space=sflag, size = 0x4, offset = 0, fixed_abs, tag = 'sflag constant byte address 0x0 - dummy sync flag']
  #allocation26 [shape = 's32[]', space=sflag, size = 0x4, offset = 0, fixed_abs, tag = 'sflag constant byte address 0x0 - dummy sync flag']
  #allocation27 [shape = 's32[]', space=sflag, size = 0x4, offset = 0, fixed_abs, tag = 'sflag constant byte address 0x0 - dummy sync flag']
  %s0 = inlined_call_operand.vmem [shape: s32[16], index: 0, kind: input, shape index: {}]
  %s1 = inlined_call_operand.hbm [shape: f32[1024,128], index: 1, kind: input, shape index: {}]
  %s2 = inlined_call_operand.hbm [shape: f32[5000,128], index: 2, kind: input, shape index: {}]
  %s3 = inlined_call_operand.hbm [shape: f32[16,128], index: 3, kind: output, shape index: {}]
  %s4 = sld [smem:[#allocation0]]
  $region73: #{embedding_forward.1} parent=0
    _
  %s6 = ssub.s32 1, %s4
  %s7 = scalar_select 0, %s6, %s4
  %s8 = sshll.u32 %s0, 4
  %s9 = int_to_ptr.vmem [resolvable:$true] %s8
  %11 = dma.vmem_to_smem %s9, 16, [#allocation5], [#allocation4]
  %12 = dma.done [#allocation4], 16
  %13 = sfence
  $region1: #{embedding_forward.1} parent=0
    #allocation6 [shape = 'u8[4096]{0}', space=vmem, size = 0x1000, scoped, tag = 'input window, operand 2, single buffered']
    #allocation7 [shape = 's32[2]{0}', space=sflag, size = 0x8, scoped, tag = 'scoped memory for embedding_forward.1']
    #allocation8 [shape = 's32[2]{0}', space=sflag, size = 0x8, scoped, tag = 'scoped memory for embedding_forward.1']
    #allocation9 [shape = 'u8[8192]{0}', space=vmem, size = 0x2000, scoped, tag = 'output window, operand 0']
    %14 = vsyncpa [#allocation7], 0
    %15 = vsyncpa [#allocation8], 0
    %s16 = scalar_lea.sflag [#allocation8], 1
    %17 = vsyncpa %s16, 0
    loop: start=0, step=1, limit=4
    $region2: #{embedding_forward.1} parent=1 // loop_pre_header
      _
    $region3: #{embedding_forward.1} parent=1 // loop_header
      %s19 = sphi 0, %s23
      %p20 = scmp.ge.s32.totalorder %s19, 4
      %s27 = sphi 0, %s27
      %s29 = sphi 0, %s27
      %s30 = sphi 0, %s29
      %s44 = sphi 0, %s30
      %s50 = sphi 0, %s52
      %s53 = sphi 0, %s50
      %s54 = sphi 0, %s53
      %s70 = sphi 0, %s54
    $region4: #{embedding_forward.1} parent=1 // loop_header_branch
      %22 = sbr.rel (%p20) target = $region8
    $region5: #{embedding_forward.1} parent=1 // loop_body
      %s24 = ssub.s32 %s19, 1
      %s25 = ssub.s32 %s19, 2
      %s26 = sadd.s32 %s19, 1
      %s28 = sadd.s32 %s27, 1
      %p31 = scmp.eq.s32.totalorder %s19, 1
      %p32 = scmp.ne.s32.totalorder %s27, %s29
      %p33 = scmp.eq.s32.totalorder %s19, 0
      %p34 = por %p32, %p33
      %p35 = scmp.ne.s32.totalorder %s27, %s29
      %p36 = scmp.eq.s32.totalorder %s24, 1
      %p37 = por %p35, %p36
      %p38 = scmp.ne.s32.totalorder %s29, %s30
      %p39 = scmp.eq.s32.totalorder %s24, 0
      %p40 = por %p38, %p39
      %p41 = scmp.ne.s32.totalorder %s29, %s30
      %p42 = scmp.eq.s32.totalorder %s25, 1
      %p43 = por %p41, %p42
      %p45 = scmp.ne.s32.totalorder %s30, %s44
      %p46 = scmp.eq.s32.totalorder %s25, 0
      %p47 = por %p45, %p46
      %s48 = ssub.s32 %s19, %s26
      %p49 = scmp.eq.s32.totalorder %s48, 0
      %s51 = sadd.s32 %s50, 1
      %s52 = scalar_select %p49, %s50, %s51
      %p55 = pneg %p49
      %p56 = scmp.eq.s32.totalorder %s19, 1
      %p57 = por %p55, %p56
      %p58 = scmp.ne.s32.totalorder %s50, %s53
      %p59 = scmp.eq.s32.totalorder %s19, 0
      %p60 = por %p58, %p59
      %p61 = scmp.ne.s32.totalorder %s50, %s53
      %p62 = scmp.eq.s32.totalorder %s24, 1
      %p63 = por %p61, %p62
      %p64 = scmp.ne.s32.totalorder %s53, %s54
      %p65 = scmp.eq.s32.totalorder %s24, 0
      %p66 = por %p64, %p65
      %p67 = scmp.ne.s32.totalorder %s53, %s54
      %p68 = scmp.eq.s32.totalorder %s25, 1
      %p69 = por %p67, %p68
      %p71 = scmp.ne.s32.totalorder %s54, %s70
      %p72 = scmp.eq.s32.totalorder %s25, 0
      %p73 = por %p71, %p72
      %p74 = scmp.le.s32.totalorder 1, %s19
      %p75 = scmp.lt.s32.totalorder %s19, 3
      %p76 = pnand %p74, %p75
      %p77 = pneg %p76
      // Predicated region
      $region9: #{embedding_forward.1} parent=5 // pred_check
        _
      $region10: #{embedding_forward.1} parent=5 // pred_check_branch
        %79 = sbr.rel (%p76) target = $region12
      $region11: #{embedding_forward.1} parent=5 // pred_region
        %s80 = ssub.s32 %s19, 1
        // Predicated region
        $region13: #{embedding_forward.1} parent=11 // pred_check
          %p81 = pneg %p40
        $region14: #{embedding_forward.1} parent=11 // pred_check_branch
          %83 = sbr.rel (%p81) target = $region16
        $region15: #{embedding_forward.1} parent=11 // pred_region
          %s85 = ssub.s32 128, 128
          %86 = vsyncadd [#allocation7], %s85
          %s88 = sshll.u32 [#allocation6], 4
          %s89 = int_to_ptr.vmem [resolvable:$true] %s88
          %91 = dma.hbm_to_vmem [thread:$0]  %s2, 128, %s89, [#allocation7]
        $region16: #{embedding_forward.1} parent=11 // pred_fallthru
          _
      $region12: #{embedding_forward.1} parent=5 // pred_fallthru
        _
      %p92 = scmp.lt.s32.totalorder %s19, 2
      // Predicated region
      $region17: #{embedding_forward.1} parent=5 // pred_check
        %p93 = pneg %p92
      $region18: #{embedding_forward.1} parent=5 // pred_check_branch
        %95 = sbr.rel (%p93) target = $region20
      $region19: #{embedding_forward.1} parent=5 // pred_region
        _
      $region20: #{embedding_forward.1} parent=5 // pred_fallthru
        _
      %p96 = scmp.le.s32.totalorder 1, %s19
      %p97 = scmp.lt.s32.totalorder %s19, 3
      %p98 = pnand %p96, %p97
      %p99 = pneg %p98
      // Predicated region
      $region21: #{embedding_forward.1} parent=5 // pred_check
        _
      $region22: #{embedding_forward.1} parent=5 // pred_check_branch
        %101 = sbr.rel (%p98) target = $region24
      $region23: #{embedding_forward.1} parent=5 // pred_region
        %s102 = ssub.s32 %s19, 1
        // Predicated region
        $region25: #{embedding_forward.1} parent=23 // pred_check
          %p103 = pneg %p40
        $region26: #{embedding_forward.1} parent=23 // pred_check_branch
          %105 = sbr.rel (%p103) target = $region28
        $region27: #{embedding_forward.1} parent=23 // pred_region
          %106 = dma.done [#allocation7], 128
        $region28: #{embedding_forward.1} parent=23 // pred_fallthru
          _
        %p107 = pneg %p40
        %p108 = pneg %p37
        %p109 = pneg %p66
        %p110 = pneg %p63
        %s111 = sand.u32 %s53, 1
        %s112 = scalar_lea.sflag [#allocation8], %s111
        %s113 = sand.u32 %s53, 1
        %s114 = smul.addr %s113, 8
        %s115 = scalar_lea.vmem [#allocation9], %s114
        %s116 = smul.u32 %s24, 8
        %s117 = sld [smem:[#allocation5 + %s116]]
        %s118 = smul.addr %s117, 16
        %s119 = scalar_lea.hbm %s1, %s118
        // Predicated region
        $region29: #{embedding_forward.1} parent=23 // pred_check
          _
        $region30: #{embedding_forward.1} parent=23 // pred_check_branch
          %121 = sbr.rel target = $region32
        $region31: #{embedding_forward.1} parent=23 // pred_region
          %122 = sst [smem:[#allocation12]] [#allocation11]
          %123 = sst [smem:[#allocation13]] [#allocation10]
        $region32: #{embedding_forward.1} parent=23 // pred_fallthru
          _
        %125 = shalt.err (0)
        %s127 = sshll.u32 [#allocation2], 4
        %s128 = int_to_ptr.vmem [resolvable:$true] %s127
        %130 = dma.hbm_to_vmem [thread:$0]  %s119, 16, %s128, [#allocation3]
        %s131 = sadd.s32 %s116, 1
        %s132 = sld [smem:[#allocation5 + %s131]]
        %s133 = smul.addr %s132, 16
        %s134 = scalar_lea.hbm %s1, %s133
        %s135 = scalar_lea.vmem [#allocation2], 1
        %s136 = scalar_lea.sflag [#allocation3], 1
        // Predicated region
        $region33: #{embedding_forward.1} parent=23 // pred_check
          _
        $region34: #{embedding_forward.1} parent=23 // pred_check_branch
          %138 = sbr.rel target = $region36
        $region35: #{embedding_forward.1} parent=23 // pred_region
          %139 = sst [smem:[#allocation12]] [#allocation15]
          %140 = sst [smem:[#allocation13]] [#allocation14]
        $region36: #{embedding_forward.1} parent=23 // pred_fallthru
          _
        %142 = shalt.err (0)
        %s144 = sshll.u32 %s135, 4
        %s145 = int_to_ptr.vmem [resolvable:$true] %s144
        %147 = dma.hbm_to_vmem [thread:$0]  %s134, 16, %s145, %s136
        %s148 = sadd.s32 %s116, 2
        %s149 = sld [smem:[#allocation5 + %s148]]
        %s150 = smul.addr %s149, 16
        %s151 = scalar_lea.hbm %s1, %s150
        %s152 = scalar_lea.vmem [#allocation2], 2
        %s153 = scalar_lea.sflag [#allocation3], 2
        // Predicated region
        $region37: #{embedding_forward.1} parent=23 // pred_check
          _
        $region38: #{embedding_forward.1} parent=23 // pred_check_branch
          %155 = sbr.rel target = $region40
        $region39: #{embedding_forward.1} parent=23 // pred_region
          %156 = sst [smem:[#allocation12]] [#allocation17]
          %157 = sst [smem:[#allocation13]] [#allocation16]
        $region40: #{embedding_forward.1} parent=23 // pred_fallthru
          _
        %159 = shalt.err (0)
        %s161 = sshll.u32 %s152, 4
        %s162 = int_to_ptr.vmem [resolvable:$true] %s161
        %164 = dma.hbm_to_vmem [thread:$0]  %s151, 16, %s162, %s153
        %s165 = sadd.s32 %s116, 3
        %s166 = sld [smem:[#allocation5 + %s165]]
        %s167 = smul.addr %s166, 16
        %s168 = scalar_lea.hbm %s1, %s167
        %s169 = scalar_lea.vmem [#allocation2], 3
        %s170 = scalar_lea.sflag [#allocation3], 3
        // Predicated region
        $region41: #{embedding_forward.1} parent=23 // pred_check
          _
        $region42: #{embedding_forward.1} parent=23 // pred_check_branch
          %172 = sbr.rel target = $region44
        $region43: #{embedding_forward.1} parent=23 // pred_region
          %173 = sst [smem:[#allocation12]] [#allocation19]
          %174 = sst [smem:[#allocation13]] [#allocation18]
        $region44: #{embedding_forward.1} parent=23 // pred_fallthru
          _
        %176 = shalt.err (0)
        %s178 = sshll.u32 %s169, 4
        %s179 = int_to_ptr.vmem [resolvable:$true] %s178
        %181 = dma.hbm_to_vmem [thread:$0]  %s168, 16, %s179, %s170
        %s182 = sadd.s32 %s116, 4
        %s183 = sld [smem:[#allocation5 + %s182]]
        %s184 = smul.addr %s183, 16
        %s185 = scalar_lea.hbm %s1, %s184
        %s186 = scalar_lea.vmem [#allocation2], 4
        %s187 = scalar_lea.sflag [#allocation3], 4
        // Predicated region
        $region45: #{embedding_forward.1} parent=23 // pred_check
          _
        $region46: #{embedding_forward.1} parent=23 // pred_check_branch
          %189 = sbr.rel target = $region48
        $region47: #{embedding_forward.1} parent=23 // pred_region
          %190 = sst [smem:[#allocation12]] [#allocation21]
          %191 = sst [smem:[#allocation13]] [#allocation20]
        $region48: #{embedding_forward.1} parent=23 // pred_fallthru
          _
        %193 = shalt.err (0)
        %s195 = sshll.u32 %s186, 4
        %s196 = int_to_ptr.vmem [resolvable:$true] %s195
        %198 = dma.hbm_to_vmem [thread:$0]  %s185, 16, %s196, %s187
        %s199 = sadd.s32 %s116, 5
        %s200 = sld [smem:[#allocation5 + %s199]]
        %s201 = smul.addr %s200, 16
        %s202 = scalar_lea.hbm %s1, %s201
        %s203 = scalar_lea.vmem [#allocation2], 5
        %s204 = scalar_lea.sflag [#allocation3], 5
        // Predicated region
        $region49: #{embedding_forward.1} parent=23 // pred_check
          _
        $region50: #{embedding_forward.1} parent=23 // pred_check_branch
          %206 = sbr.rel target = $region52
        $region51: #{embedding_forward.1} parent=23 // pred_region
          %207 = sst [smem:[#allocation12]] [#allocation23]
          %208 = sst [smem:[#allocation13]] [#allocation22]
        $region52: #{embedding_forward.1} parent=23 // pred_fallthru
          _
        %210 = shalt.err (0)
        %s212 = sshll.u32 %s203, 4
        %s213 = int_to_ptr.vmem [resolvable:$true] %s212
        %215 = dma.hbm_to_vmem [thread:$0]  %s202, 16, %s213, %s204
        %s216 = sadd.s32 %s116, 6
        %s217 = sld [smem:[#allocation5 + %s216]]
        %s218 = smul.addr %s217, 16
        %s219 = scalar_lea.hbm %s1, %s218
        %s220 = scalar_lea.vmem [#allocation2], 6
        %s221 = scalar_lea.sflag [#allocation3], 6
        // Predicated region
        $region53: #{embedding_forward.1} parent=23 // pred_check
          _
        $region54: #{embedding_forward.1} parent=23 // pred_check_branch
          %223 = sbr.rel target = $region56
        $region55: #{embedding_forward.1} parent=23 // pred_region
          %224 = sst [smem:[#allocation12]] [#allocation25]
          %225 = sst [smem:[#allocation13]] [#allocation24]
        $region56: #{embedding_forward.1} parent=23 // pred_fallthru
          _
        %227 = shalt.err (0)
        %s229 = sshll.u32 %s220, 4
        %s230 = int_to_ptr.vmem [resolvable:$true] %s229
        %232 = dma.hbm_to_vmem [thread:$0]  %s219, 16, %s230, %s221
        %s233 = sadd.s32 %s116, 7
        %s234 = sld [smem:[#allocation5 + %s233]]
        %s235 = smul.addr %s234, 16
        %s236 = scalar_lea.hbm %s1, %s235
        %s237 = scalar_lea.vmem [#allocation2], 7
        %s238 = scalar_lea.sflag [#allocation3], 7
        // Predicated region
        $region57: #{embedding_forward.1} parent=23 // pred_check
          _
        $region58: #{embedding_forward.1} parent=23 // pred_check_branch
          %240 = sbr.rel target = $region60
        $region59: #{embedding_forward.1} parent=23 // pred_region
          %241 = sst [smem:[#allocation12]] [#allocation27]
          %242 = sst [smem:[#allocation13]] [#allocation26]
        $region60: #{embedding_forward.1} parent=23 // pred_fallthru
          _
        %244 = shalt.err (0)
        %s246 = sshll.u32 %s237, 4
        %s247 = int_to_ptr.vmem [resolvable:$true] %s246
        %249 = dma.hbm_to_vmem [thread:$0]  %s236, 16, %s247, %s238
        %s250 = smul.u32 1, 1
        %s251 = sshll.u32 %s250, 4
        %252 = dma.done [#allocation3], %s251
        %s253 = sshll.u32 %s250, 4
        %254 = dma.done %s136, %s253
        %s255 = sshll.u32 %s250, 4
        %256 = dma.done %s153, %s255
        %s257 = sshll.u32 %s250, 4
        %258 = dma.done %s170, %s257
        %s259 = sshll.u32 %s250, 4
        %260 = dma.done %s187, %s259
        %s261 = sshll.u32 %s250, 4
        %262 = dma.done %s204, %s261
        %s263 = sshll.u32 %s250, 4
        %264 = dma.done %s221, %s263
        %s265 = sshll.u32 %s250, 4
        %266 = dma.done %s238, %s265
        %v267 = vld [vmem:[#allocation2] sm:$0xff]
        %v268 = vmul.f32 %v267, 11.313708
        %v269 = vld [vmem:[#allocation6] sm:$0xff]
        %v270 = vadd.f32 %v268, %v269
        %271 = vst [vmem:[%s115] sm:$0xff] %v270
        %s272 = sand.u32 %s53, 1
        %s273 = scalar_lea.sflag [#allocation8], %s272
        %s274 = sand.u32 %s53, 1
        %s275 = smul.addr %s274, 8
        %s276 = scalar_lea.vmem [#allocation9], %s275
        // Predicated region
        $region61: #{embedding_forward.1} parent=23 // pred_check
          %p277 = pneg %p63
        $region62: #{embedding_forward.1} parent=23 // pred_check_branch
          %279 = sbr.rel (%p277) target = $region64
        $region63: #{embedding_forward.1} parent=23 // pred_region
          %s281 = ssub.s32 128, 128
          %282 = vsyncadd %s273, %s281
          %s283 = smul.addr %s24, 128
          %s284 = scalar_lea.hbm %s3, %s283
          %s286 = sshll.u32 %s276, 4
          %s287 = int_to_ptr.vmem [resolvable:$true] %s286
          %289 = dma.vmem_to_hbm [thread:$0]  %s287, 128, %s284, %s273
        $region64: #{embedding_forward.1} parent=23 // pred_fallthru
          _
      $region24: #{embedding_forward.1} parent=5 // pred_fallthru
        _
      %p290 = scmp.le.s32.totalorder 2, %s19
      // Predicated region
      $region65: #{embedding_forward.1} parent=5 // pred_check
        %p291 = pneg %p290
      $region66: #{embedding_forward.1} parent=5 // pred_check_branch
        %293 = sbr.rel (%p291) target = $region68
      $region67: #{embedding_forward.1} parent=5 // pred_region
        %s294 = ssub.s32 %s19, 2
        // Predicated region
        $region69: #{embedding_forward.1} parent=67 // pred_check
          %p295 = pneg %p69
        $region70: #{embedding_forward.1} parent=67 // pred_check_branch
          %297 = sbr.rel (%p295) target = $region72
        $region71: #{embedding_forward.1} parent=67 // pred_region
          %s298 = sand.u32 %s54, 1
          %s299 = scalar_lea.sflag [#allocation8], %s298
          %s300 = sand.u32 %s54, 1
          %s301 = smul.addr %s300, 8
          %s302 = scalar_lea.vmem [#allocation9], %s301
          %303 = dma.done %s299, 128
        $region72: #{embedding_forward.1} parent=67 // pred_fallthru
          _
      $region68: #{embedding_forward.1} parent=5 // pred_fallthru
        _
    $region6: #{embedding_forward.1} parent=1 // loop_footer
      %s23 = sadd.s32 1, %s19
    $region7: #{embedding_forward.1} parent=1 // loop_footer_branch
      %18 = sbr.rel target = $region3
    $region8: #{embedding_forward.1} parent=1 // loop_exit
      _
    %304 = vsyncpa [#allocation7], 1
    %s305 = scalar_lea.sflag [#allocation7], 1
    %306 = vsyncpa %s305, 1
    %307 = vsyncpa [#allocation8], 1
    %s308 = scalar_lea.sflag [#allocation8], 1
    %309 = vsyncpa %s308, 1
  %310 = vsyncmov [#allocation3]
  %s311 = vpop.sfrf %310
  %p312 = scmp.eq.s32.totalorder %s311, 0
  %p313 = pneg %p312
  %315 = shalt.err (%p313)
  %s316 = scalar_lea.sflag [#allocation3], 1
  %317 = vsyncmov %s316
  %s318 = vpop.sfrf %317
  %p319 = scmp.eq.s32.totalorder %s318, 0
  %p320 = pneg %p319
  %322 = shalt.err (%p320)
  %s323 = scalar_lea.sflag [#allocation3], 2
  %324 = vsyncmov %s323
  %s325 = vpop.sfrf %324
  %p326 = scmp.eq.s32.totalorder %s325, 0
  %p327 = pneg %p326
  %329 = shalt.err (%p327)
  %s330 = scalar_lea.sflag [#allocation3], 3
  %331 = vsyncmov %s330
  %s332 = vpop.sfrf %331
  %p333 = scmp.eq.s32.totalorder %s332, 0
  %p334 = pneg %p333
  %336 = shalt.err (%p334)
  %s337 = scalar_lea.sflag [#allocation3], 4
  %338 = vsyncmov %s337
  %s339 = vpop.sfrf %338
  %p340 = scmp.eq.s32.totalorder %s339, 0
  %p341 = pneg %p340
  %343 = shalt.err (%p341)
  %s344 = scalar_lea.sflag [#allocation3], 5
  %345 = vsyncmov %s344
  %s346 = vpop.sfrf %345
  %p347 = scmp.eq.s32.totalorder %s346, 0
  %p348 = pneg %p347
  %350 = shalt.err (%p348)
  %s351 = scalar_lea.sflag [#allocation3], 6
  %352 = vsyncmov %s351
  %s353 = vpop.sfrf %352
  %p354 = scmp.eq.s32.totalorder %s353, 0
  %p355 = pneg %p354
  %357 = shalt.err (%p355)
  %s358 = scalar_lea.sflag [#allocation3], 7
  %359 = vsyncmov %s358
  %s360 = vpop.sfrf %359
  %p361 = scmp.eq.s32.totalorder %s360, 0
  %p362 = pneg %p361
  %364 = shalt.err (%p362)

</llo_original>
